<compile_context>
chip_gen: v6e
topology: v6e:2x2x1
jax: 0.10.0
libtpu: 0.0.40
codegen_flags: <defaults>
</compile_context>

<pallas_src>
import functools

import jax
import jax.numpy as jnp
from jax.experimental import pallas as pl
from jax.experimental.pallas import tpu as pltpu

EPS = 1e-5
_VMEM_LIMIT = 32 * 1024 * 1024   # safe on v5e/v6e (128 MiB) and v7x (64 MiB)


def _round_up(x, m):
    return (x + m - 1) // m * m


def _conv_stats_kernel(a_ref, w_ref, sum_ref, sumsq_ref):
    # a_ref:   (tm, K_pad)   bf16 im2col tile
    # w_ref:   (K_pad, C_pad) bf16 flattened conv weight (resident)
    # sum_ref, sumsq_ref: (1, C_pad) f32 accumulators, resident across the grid.
    @pl.when(pl.program_id(0) == 0)
    def _init():
        sum_ref[...] = jnp.zeros_like(sum_ref)
        sumsq_ref[...] = jnp.zeros_like(sumsq_ref)

    conv = jnp.dot(a_ref[...], w_ref[...], preferred_element_type=jnp.float32)
    sum_ref[...] += jnp.sum(conv, axis=0, keepdims=True)
    sumsq_ref[...] += jnp.sum(conv * conv, axis=0, keepdims=True)


def _conv_apply_kernel(a_ref, w_ref, scale_ref, shift_ref, o_ref):
    # Recompute the conv tile and apply folded BN (scale/shift) + ReLU.
    conv = jnp.dot(a_ref[...], w_ref[...], preferred_element_type=jnp.float32)
    y = conv * scale_ref[...] + shift_ref[...]
    o_ref[...] = jnp.maximum(y, 0.0).astype(o_ref.dtype)


def _im2col_nhwc(x_nhwc, kh, kw, stride, padding, dilation):
    """Unfold NHWC input into (N, H_out, W_out, KH*KW*C_in) patches."""
    n, h, w, c = x_nhwc.shape
    h_out = (h + 2 * padding - dilation * (kh - 1) - 1) // stride + 1
    w_out = (w + 2 * padding - dilation * (kw - 1) - 1) // stride + 1
    x_p = jnp.pad(x_nhwc, ((0, 0), (padding, padding), (padding, padding), (0, 0)))
    cols = []
    for ih in range(kh):
        for iw in range(kw):
            h0 = ih * dilation
            w0 = iw * dilation
            patch = x_p[:, h0:h0 + stride * h_out:stride,
                        w0:w0 + stride * w_out:stride, :]
            cols.append(patch)
    # ordering along last axis: (kh, kw, c_in) — must match weight flattening.
    patches = jnp.concatenate(cols, axis=-1)
    return patches, h_out, w_out


@functools.partial(jax.jit,
                   static_argnames=("stride", "padding", "dilation", "block_m"))
def conv_bn_relu(x_nchw, weight_oihw, gamma, beta, *,
                 stride, padding, dilation, block_m=256):
    n, c_in, h, w = x_nchw.shape
    c_out, _, kh, kw = weight_oihw.shape

    # ---- glue: layout + im2col (plain JAX), cast to bf16 early ----
    x_nhwc = jnp.transpose(x_nchw, (0, 2, 3, 1)).astype(jnp.bfloat16)
    patches, h_out, w_out = _im2col_nhwc(x_nhwc, kh, kw, stride, padding, dilation)
    m = n * h_out * w_out
    k = kh * kw * c_in

    # Padded problem sizes.
    k_pad = _round_up(k, 16)          # bf16 sublane packing on the weight tile
    c_pad = _round_up(c_out, 128)     # lane-dense stores + full MXU result width
    tm = _round_up(min(block_m, _round_up(m, 8)), 16)
    m_pad = _round_up(m, tm)
    n_tiles = m_pad // tm

    a = patches.reshape(m, k)
    a = jnp.pad(a, ((0, m_pad - m), (0, k_pad - k)))  # bf16; zero pads are exact zeros
    # (C_out, C_in, KH, KW) -> (KH, KW, C_in, C_out) -> (K, C_out), then pad.
    w_mat = jnp.transpose(weight_oihw, (2, 3, 1, 0)).reshape(k, c_out)
    w_mat = jnp.pad(w_mat, ((0, k_pad - k), (0, c_pad - c_out))).astype(jnp.bfloat16)
    gamma_p = jnp.pad(gamma.astype(jnp.float32), (0, c_pad - c_out)).reshape(1, c_pad)
    beta_p = jnp.pad(beta.astype(jnp.float32), (0, c_pad - c_out)).reshape(1, c_pad)

    # ---- pass 1: per-channel sum / sum-of-squares of the conv output ----
    col_sum, col_sumsq = pl.pallas_call(
        _conv_stats_kernel,
        out_shape=(jax.ShapeDtypeStruct((1, c_pad), jnp.float32),
                   jax.ShapeDtypeStruct((1, c_pad), jnp.float32)),
        grid=(n_tiles,),
        in_specs=[
            pl.BlockSpec((tm, k_pad), lambda i: (i, 0)),
            pl.BlockSpec((k_pad, c_pad), lambda i: (0, 0)),
        ],
        out_specs=(
            pl.BlockSpec((1, c_pad), lambda i: (0, 0)),
            pl.BlockSpec((1, c_pad), lambda i: (0, 0)),
        ),
        compiler_params=pltpu.CompilerParams(
            dimension_semantics=("arbitrary",),     # reduction into resident outputs
            vmem_limit_bytes=_VMEM_LIMIT),
    )(a, w_mat)

    # ---- tiny O(C) glue: fold BN batch stats into per-channel scale/shift ----
    mean = col_sum / m                                     # true count, not m_pad
    var = jnp.maximum(col_sumsq / m - mean * mean, 0.0)    # biased batch variance
    inv = jax.lax.rsqrt(var + EPS)
    scale = gamma_p * inv                                  # padded channels: gamma=0 -> scale=0
    shift = beta_p - mean * scale

    # ---- pass 2: conv (recomputed) * scale + shift, ReLU ----
    out_flat = pl.pallas_call(
        _conv_apply_kernel,
        out_shape=jax.ShapeDtypeStruct((m_pad, c_pad), jnp.float32),
        grid=(n_tiles,),
        in_specs=[
            pl.BlockSpec((tm, k_pad), lambda i: (i, 0)),
            pl.BlockSpec((k_pad, c_pad), lambda i: (0, 0)),
            pl.BlockSpec((1, c_pad), lambda i: (0, 0)),
            pl.BlockSpec((1, c_pad), lambda i: (0, 0)),
        ],
        out_specs=pl.BlockSpec((tm, c_pad), lambda i: (i, 0)),
        compiler_params=pltpu.CompilerParams(
            dimension_semantics=("parallel",),      # independent tiles -> megacore on v7x
            vmem_limit_bytes=_VMEM_LIMIT),
    )(a, w_mat, scale, shift)

    # ---- glue: strip padding, back to NCHW ----
    out = out_flat[:m, :c_out].reshape(n, h_out, w_out, c_out)
    return jnp.transpose(out, (0, 3, 1, 2))


def _reference(x, w, gamma, beta, stride, padding, dilation):
    conv = jax.lax.conv_general_dilated(
        x, w, window_strides=(stride, stride),
        padding=((padding, padding), (padding, padding)),
        rhs_dilation=(dilation, dilation),
        dimension_numbers=("NCHW", "OIHW", "NCHW"),
        precision=jax.lax.Precision.HIGHEST)
    mean = conv.mean(axis=(0, 2, 3), keepdims=True)
    var = ((conv - mean) ** 2).mean(axis=(0, 2, 3), keepdims=True)
    y = (conv - mean) * jax.lax.rsqrt(var + EPS) \
        * gamma[None, :, None, None] + beta[None, :, None, None]
    return jnp.maximum(y, 0.0)


if __name__ == "__main__":
    # Module config: ConvBNReLU(c_in=4, c_out=8, kernel_size=3, stride=1, padding=1, dilation=1)
    c_in, c_out, ksize, stride, padding, dilation = 4, 8, 3, 1, 1, 1
    n, h, w = 2, 16, 16

    key = jax.random.PRNGKey(0)
    kx, kw_, kg, kb = jax.random.split(key, 4)
    x = jax.random.normal(kx, (n, c_in, h, w), dtype=jnp.float32)
    weight = jax.random.normal(kw_, (c_out, c_in, ksize, ksize), dtype=jnp.float32) * 0.1
    gamma = 1.0 + 0.1 * jax.random.normal(kg, (c_out,), dtype=jnp.float32)
    beta = 0.1 * jax.random.normal(kb, (c_out,), dtype=jnp.float32)

    out = conv_bn_relu(x, weight, gamma, beta,
                       stride=stride, padding=padding, dilation=dilation)
    out = jax.block_until_ready(out)
    assert out.shape == (n, c_out, h, w), out.shape

    # Tight check against a reference that uses the same bf16-quantized conv
    # inputs (isolates kernel-implementation error from the intentional bf16 cast).
    xq = x.astype(jnp.bfloat16).astype(jnp.float32)
    wq = weight.astype(jnp.bfloat16).astype(jnp.float32)
    ref_q = _reference(xq, wq, gamma, beta, stride, padding, dilation)
    err_q = float(jnp.max(jnp.abs(out - ref_q)))
    assert jnp.allclose(out, ref_q, atol=2e-3, rtol=2e-3), err_q

    # Looser sanity check against exact f32 module semantics (bf16 MXU inputs
    # introduce ~1e-2-level error at these magnitudes).
    ref = _reference(x, weight, gamma, beta, stride, padding, dilation)
    err = float(jnp.max(jnp.abs(out - ref)))
    assert jnp.allclose(out, ref, atol=5e-2, rtol=5e-2), err

    print("KERNEL_OK")
</pallas_src>

<mosaic_0001>
module attributes {stable_mosaic.version = 11 : i64} {
  func.func @_conv_stats_kernel(%arg0: i32, %arg1: memref<256x48xbf16, #tpu.memory_space<vmem>>, %arg2: memref<48x128xbf16, #tpu.memory_space<vmem>>, %arg3: memref<1x128xf32, #tpu.memory_space<vmem>>, %arg4: memref<1x128xf32, #tpu.memory_space<vmem>>) attributes {dimension_semantics = [#tpu.dimension_semantics<arbitrary>], iteration_bounds = array<i64: 2>, scalar_prefetch = 0 : i64, scratch_operands = 0 : i64, tpu.core_type = #tpu.core_type<tc>, window_params = [{transform_indices = @transform_0, window_bounds = array<i64: 256, 48>}, {pipeline_mode = #tpu.pipeline_mode<synchronous>, transform_indices = @transform_1, window_bounds = array<i64: 48, 128>}, {pipeline_mode = #tpu.pipeline_mode<synchronous>, transform_indices = @transform_2, window_bounds = array<i64: 1, 128>}, {pipeline_mode = #tpu.pipeline_mode<synchronous>, transform_indices = @transform_3, window_bounds = array<i64: 1, 128>}]} {
    %c0_i32 = arith.constant 0 : i32
    %0 = arith.cmpi eq, %arg0, %c0_i32 : i32
    %1 = arith.extui %0 : i1 to i32
    %c0_i32_0 = arith.constant 0 : i32
    %2 = arith.cmpi ne, %1, %c0_i32_0 : i32
    scf.if %2 {
      %cst_14 = arith.constant 0.000000e+00 : f32
      %17 = vector.broadcast %cst_14 : f32 to vector<1x128xf32>
      %c0_15 = arith.constant 0 : index
      %c0_16 = arith.constant 0 : index
      %18 = vector.load %arg3[%c0_15, %c0_16] : memref<1x128xf32, #tpu.memory_space<vmem>>, vector<1x128xf32>
      tpu.vector_store %arg3[%c0_15, %c0_16], %17 {strides = array<i32>} : memref<1x128xf32, #tpu.memory_space<vmem>>, vector<1x128xf32>,
      %cst_17 = arith.constant 0.000000e+00 : f32
      %19 = vector.broadcast %cst_17 : f32 to vector<1x128xf32>
      %c0_18 = arith.constant 0 : index
      %c0_19 = arith.constant 0 : index
      %20 = vector.load %arg4[%c0_18, %c0_19] : memref<1x128xf32, #tpu.memory_space<vmem>>, vector<1x128xf32>
      tpu.vector_store %arg4[%c0_18, %c0_19], %19 {strides = array<i32>} : memref<1x128xf32, #tpu.memory_space<vmem>>, vector<1x128xf32>,
    } else {
    }
    %c0 = arith.constant 0 : index
    %c0_1 = arith.constant 0 : index
    %3 = vector.load %arg1[%c0, %c0_1] : memref<256x48xbf16, #tpu.memory_space<vmem>>, vector<256x48xbf16>
    %c0_2 = arith.constant 0 : index
    %c0_3 = arith.constant 0 : index
    %4 = vector.load %arg2[%c0_2, %c0_3] : memref<48x128xbf16, #tpu.memory_space<vmem>>, vector<48x128xbf16>
    %cst = arith.constant dense<0.000000e+00> : vector<256x128xf32>
    %5 = tpu.matmul %3, %4, %cst {dimension_numbers = #tpu.dot_dimension_numbers<[1], [0], [0], [1], [0, 0, 1, 1], [], []>} : vector<256x48xbf16>, vector<48x128xbf16>, vector<256x128xf32> -> vector<256x128xf32>
    %c0_4 = arith.constant 0 : index
    %c0_5 = arith.constant 0 : index
    %6 = vector.load %arg3[%c0_4, %c0_5] : memref<1x128xf32, #tpu.memory_space<vmem>>, vector<1x128xf32>
    %cst_6 = arith.constant dense<0.000000e+00> : vector<128xf32>
    %7 = vector.multi_reduction <add>, %5, %cst_6 [0] : vector<256x128xf32> to vector<128xf32>
    %8 = vector.shape_cast %7 : vector<128xf32> to vector<1x128xf32>
    %9 = arith.addf %6, %8 : vector<1x128xf32>
    %c0_7 = arith.constant 0 : index
    %c0_8 = arith.constant 0 : index
    %10 = vector.load %arg3[%c0_7, %c0_8] : memref<1x128xf32, #tpu.memory_space<vmem>>, vector<1x128xf32>
    tpu.vector_store %arg3[%c0_7, %c0_8], %9 {strides = array<i32>} : memref<1x128xf32, #tpu.memory_space<vmem>>, vector<1x128xf32>,
    %c0_9 = arith.constant 0 : index
    %c0_10 = arith.constant 0 : index
    %11 = vector.load %arg4[%c0_9, %c0_10] : memref<1x128xf32, #tpu.memory_space<vmem>>, vector<1x128xf32>
    %12 = arith.mulf %5, %5 : vector<256x128xf32>
    %cst_11 = arith.constant dense<0.000000e+00> : vector<128xf32>
    %13 = vector.multi_reduction <add>, %12, %cst_11 [0] : vector<256x128xf32> to vector<128xf32>
    %14 = vector.shape_cast %13 : vector<128xf32> to vector<1x128xf32>
    %15 = arith.addf %11, %14 : vector<1x128xf32>
    %c0_12 = arith.constant 0 : index
    %c0_13 = arith.constant 0 : index
    %16 = vector.load %arg4[%c0_12, %c0_13] : memref<1x128xf32, #tpu.memory_space<vmem>>, vector<1x128xf32>
    tpu.vector_store %arg4[%c0_12, %c0_13], %15 {strides = array<i32>} : memref<1x128xf32, #tpu.memory_space<vmem>>, vector<1x128xf32>,
    return
  }
  func.func @transform_0(%arg0: i32) -> (i32, i32) {
    %c0_i32 = arith.constant 0 : i32
    %c0_i32_0 = arith.constant 0 : i32
    return %arg0, %c0_i32 : i32, i32
  }
  func.func @transform_1(%arg0: i32) -> (i32, i32) {
    %c0_i32 = arith.constant 0 : i32
    %c0_i32_0 = arith.constant 0 : i32
    %c0_i32_1 = arith.constant 0 : i32
    return %c0_i32, %c0_i32_0 : i32, i32
  }
  func.func @transform_2(%arg0: i32) -> (i32, i32) {
    %c0_i32 = arith.constant 0 : i32
    %c0_i32_0 = arith.constant 0 : i32
    %c0_i32_1 = arith.constant 0 : i32
    return %c0_i32, %c0_i32_0 : i32, i32
  }
  func.func @transform_3(%arg0: i32) -> (i32, i32) {
    %c0_i32 = arith.constant 0 : i32
    %c0_i32_0 = arith.constant 0 : i32
    %c0_i32_1 = arith.constant 0 : i32
    return %c0_i32, %c0_i32_0 : i32, i32
  }
}

module attributes {stable_mosaic.version = 11 : i64} {
  func.func @_conv_apply_kernel(%arg0: i32, %arg1: memref<256x48xbf16, #tpu.memory_space<vmem>>, %arg2: memref<48x128xbf16, #tpu.memory_space<vmem>>, %arg3: memref<1x128xf32, #tpu.memory_space<vmem>>, %arg4: memref<1x128xf32, #tpu.memory_space<vmem>>, %arg5: memref<256x128xf32, #tpu.memory_space<vmem>>) attributes {dimension_semantics = [#tpu.dimension_semantics<parallel>], iteration_bounds = array<i64: 2>, scalar_prefetch = 0 : i64, scratch_operands = 0 : i64, tpu.core_type = #tpu.core_type<tc>, window_params = [{transform_indices = @transform_0, window_bounds = array<i64: 256, 48>}, {pipeline_mode = #tpu.pipeline_mode<synchronous>, transform_indices = @transform_1, window_bounds = array<i64: 48, 128>}, {pipeline_mode = #tpu.pipeline_mode<synchronous>, transform_indices = @transform_2, window_bounds = array<i64: 1, 128>}, {pipeline_mode = #tpu.pipeline_mode<synchronous>, transform_indices = @transform_3, window_bounds = array<i64: 1, 128>}, {transform_indices = @transform_4, window_bounds = array<i64: 256, 128>}]} {
    %c0 = arith.constant 0 : index
    %c0_0 = arith.constant 0 : index
    %0 = vector.load %arg1[%c0, %c0_0] : memref<256x48xbf16, #tpu.memory_space<vmem>>, vector<256x48xbf16>
    %c0_1 = arith.constant 0 : index
    %c0_2 = arith.constant 0 : index
    %1 = vector.load %arg2[%c0_1, %c0_2] : memref<48x128xbf16, #tpu.memory_space<vmem>>, vector<48x128xbf16>
    %cst = arith.constant dense<0.000000e+00> : vector<256x128xf32>
    %2 = tpu.matmul %0, %1, %cst {dimension_numbers = #tpu.dot_dimension_numbers<[1], [0], [0], [1], [0, 0, 1, 1], [], []>} : vector<256x48xbf16>, vector<48x128xbf16>, vector<256x128xf32> -> vector<256x128xf32>
    %c0_3 = arith.constant 0 : index
    %c0_4 = arith.constant 0 : index
    %3 = vector.load %arg3[%c0_3, %c0_4] : memref<1x128xf32, #tpu.memory_space<vmem>>, vector<1x128xf32>
    %4 = vector.broadcast %3 : vector<1x128xf32> to vector<256x128xf32>
    %5 = arith.mulf %2, %4 : vector<256x128xf32>
    %c0_5 = arith.constant 0 : index
    %c0_6 = arith.constant 0 : index
    %6 = vector.load %arg4[%c0_5, %c0_6] : memref<1x128xf32, #tpu.memory_space<vmem>>, vector<1x128xf32>
    %7 = vector.broadcast %6 : vector<1x128xf32> to vector<256x128xf32>
    %8 = arith.addf %5, %7 : vector<256x128xf32>
    %cst_7 = arith.constant 0.000000e+00 : f32
    %9 = vector.broadcast %cst_7 : f32 to vector<256x128xf32>
    %10 = arith.maximumf %8, %9 : vector<256x128xf32>
    %c0_8 = arith.constant 0 : index
    %c0_9 = arith.constant 0 : index
    %11 = vector.load %arg5[%c0_8, %c0_9] : memref<256x128xf32, #tpu.memory_space<vmem>>, vector<256x128xf32>
    tpu.vector_store %arg5[%c0_8, %c0_9], %10 {strides = array<i32>} : memref<256x128xf32, #tpu.memory_space<vmem>>, vector<256x128xf32>,
    return
  }
  func.func @transform_0(%arg0: i32) -> (i32, i32) {
    %c0_i32 = arith.constant 0 : i32
    %c0_i32_0 = arith.constant 0 : i32
    return %arg0, %c0_i32 : i32, i32
  }
  func.func @transform_1(%arg0: i32) -> (i32, i32) {
    %c0_i32 = arith.constant 0 : i32
    %c0_i32_0 = arith.constant 0 : i32
    %c0_i32_1 = arith.constant 0 : i32
    return %c0_i32, %c0_i32_0 : i32, i32
  }
  func.func @transform_2(%arg0: i32) -> (i32, i32) {
    %c0_i32 = arith.constant 0 : i32
    %c0_i32_0 = arith.constant 0 : i32
    %c0_i32_1 = arith.constant 0 : i32
    return %c0_i32, %c0_i32_0 : i32, i32
  }
  func.func @transform_3(%arg0: i32) -> (i32, i32) {
    %c0_i32 = arith.constant 0 : i32
    %c0_i32_0 = arith.constant 0 : i32
    %c0_i32_1 = arith.constant 0 : i32
    return %c0_i32, %c0_i32_0 : i32, i32
  }
  func.func @transform_4(%arg0: i32) -> (i32, i32) {
    %c0_i32 = arith.constant 0 : i32
    %c0_i32_0 = arith.constant 0 : i32
    return %arg0, %c0_i32 : i32, i32
  }
}

</mosaic_0001>

<llo_original>
// kernel: conv_bn_relu.3
$region0: #{conv_bn_relu.3}
  #allocation0 [shape = 'u32[]', space=smem, size = 0x4, offset = 0x4, fixed_abs, tag = 'smem constant byte address 0x4 - core index']
  #allocation1 [shape = 'u32[144,128]{1,0:T(1,128)}', space=vmem, size = 0x12000, scoped, tag = 'internal scratch']
  %s0 = inlined_call_operand.vmem [shape: bf16[512,48], index: 0, kind: input, shape index: {}]
  %s1 = inlined_call_operand.vmem [shape: bf16[48,128], index: 1, kind: input, shape index: {}]
  %s2 = inlined_call_operand.vmem [shape: f32[1,128], index: 2, kind: input, shape index: {}]
  %s3 = inlined_call_operand.vmem [shape: f32[1,128], index: 3, kind: input, shape index: {}]
  %s4 = inlined_call_operand.vmem [shape: f32[512,128], index: 4, kind: output, shape index: {}]
  %s5 = sld [smem:[#allocation0]]
  $region49: #{conv_bn_relu.3} parent=0
    _
  %s7 = ssub.s32 1, %s5
  %s8 = scalar_select 0, %s7, %s5
  loop: start=0, step=1, limit=4
  $region2: #{conv_bn_relu.3} parent=0 // loop_pre_header
    _
  $region3: #{conv_bn_relu.3} parent=0 // loop_header
    %s10 = sphi 0, %s14
    %p11 = scmp.ge.s32.totalorder %s10, 4
    %s20 = sphi 0, %s22
    %s23 = sphi 0, %s20
    %s24 = sphi 0, %s23
    %s40 = sphi 0, %s24
    %s44 = sphi 0, %s44
    %s46 = sphi 0, %s44
    %s47 = sphi 0, %s46
    %s61 = sphi 0, %s47
    %s65 = sphi 0, %s65
    %s67 = sphi 0, %s65
    %s68 = sphi 0, %s67
    %s82 = sphi 0, %s68
    %s86 = sphi 0, %s86
    %s88 = sphi 0, %s86
    %s89 = sphi 0, %s88
    %s103 = sphi 0, %s89
    %s109 = sphi 0, %s111
    %s112 = sphi 0, %s109
    %s113 = sphi 0, %s112
    %s129 = sphi 0, %s113
  $region4: #{conv_bn_relu.3} parent=0 // loop_header_branch
    %13 = sbr.rel (%p11) target = $region8
  $region5: #{conv_bn_relu.3} parent=0 // loop_body
    %s15 = ssub.s32 %s10, 1
    %s16 = ssub.s32 %s10, 2
    %s17 = sadd.s32 %s10, 1
    %s18 = ssub.s32 %s10, %s17
    %p19 = scmp.eq.s32.totalorder %s18, 0
    %s21 = sadd.s32 %s20, 1
    %s22 = scalar_select %p19, %s20, %s21
    %p25 = pneg %p19
    %p26 = scmp.eq.s32.totalorder %s10, 1
    %p27 = por %p25, %p26
    %p28 = scmp.ne.s32.totalorder %s20, %s23
    %p29 = scmp.eq.s32.totalorder %s10, 0
    %p30 = por %p28, %p29
    %p31 = scmp.ne.s32.totalorder %s20, %s23
    %p32 = scmp.eq.s32.totalorder %s15, 1
    %p33 = por %p31, %p32
    %p34 = scmp.ne.s32.totalorder %s23, %s24
    %p35 = scmp.eq.s32.totalorder %s15, 0
    %p36 = por %p34, %p35
    %p37 = scmp.ne.s32.totalorder %s23, %s24
    %p38 = scmp.eq.s32.totalorder %s16, 1
    %p39 = por %p37, %p38
    %p41 = scmp.ne.s32.totalorder %s24, %s40
    %p42 = scmp.eq.s32.totalorder %s16, 0
    %p43 = por %p41, %p42
    %s45 = sadd.s32 %s44, 1
    %p48 = scmp.eq.s32.totalorder %s10, 1
    %p49 = scmp.ne.s32.totalorder %s44, %s46
    %p50 = scmp.eq.s32.totalorder %s10, 0
    %p51 = por %p49, %p50
    %p52 = scmp.ne.s32.totalorder %s44, %s46
    %p53 = scmp.eq.s32.totalorder %s15, 1
    %p54 = por %p52, %p53
    %p55 = scmp.ne.s32.totalorder %s46, %s47
    %p56 = scmp.eq.s32.totalorder %s15, 0
    %p57 = por %p55, %p56
    %p58 = scmp.ne.s32.totalorder %s46, %s47
    %p59 = scmp.eq.s32.totalorder %s16, 1
    %p60 = por %p58, %p59
    %p62 = scmp.ne.s32.totalorder %s47, %s61
    %p63 = scmp.eq.s32.totalorder %s16, 0
    %p64 = por %p62, %p63
    %s66 = sadd.s32 %s65, 1
    %p69 = scmp.eq.s32.totalorder %s10, 1
    %p70 = scmp.ne.s32.totalorder %s65, %s67
    %p71 = scmp.eq.s32.totalorder %s10, 0
    %p72 = por %p70, %p71
    %p73 = scmp.ne.s32.totalorder %s65, %s67
    %p74 = scmp.eq.s32.totalorder %s15, 1
    %p75 = por %p73, %p74
    %p76 = scmp.ne.s32.totalorder %s67, %s68
    %p77 = scmp.eq.s32.totalorder %s15, 0
    %p78 = por %p76, %p77
    %p79 = scmp.ne.s32.totalorder %s67, %s68
    %p80 = scmp.eq.s32.totalorder %s16, 1
    %p81 = por %p79, %p80
    %p83 = scmp.ne.s32.totalorder %s68, %s82
    %p84 = scmp.eq.s32.totalorder %s16, 0
    %p85 = por %p83, %p84
    %s87 = sadd.s32 %s86, 1
    %p90 = scmp.eq.s32.totalorder %s10, 1
    %p91 = scmp.ne.s32.totalorder %s86, %s88
    %p92 = scmp.eq.s32.totalorder %s10, 0
    %p93 = por %p91, %p92
    %p94 = scmp.ne.s32.totalorder %s86, %s88
    %p95 = scmp.eq.s32.totalorder %s15, 1
    %p96 = por %p94, %p95
    %p97 = scmp.ne.s32.totalorder %s88, %s89
    %p98 = scmp.eq.s32.totalorder %s15, 0
    %p99 = por %p97, %p98
    %p100 = scmp.ne.s32.totalorder %s88, %s89
    %p101 = scmp.eq.s32.totalorder %s16, 1
    %p102 = por %p100, %p101
    %p104 = scmp.ne.s32.totalorder %s89, %s103
    %p105 = scmp.eq.s32.totalorder %s16, 0
    %p106 = por %p104, %p105
    %s107 = ssub.s32 %s10, %s17
    %p108 = scmp.eq.s32.totalorder %s107, 0
    %s110 = sadd.s32 %s109, 1
    %s111 = scalar_select %p108, %s109, %s110
    %p114 = pneg %p108
    %p115 = scmp.eq.s32.totalorder %s10, 1
    %p116 = por %p114, %p115
    %p117 = scmp.ne.s32.totalorder %s109, %s112
    %p118 = scmp.eq.s32.totalorder %s10, 0
    %p119 = por %p117, %p118
    %p120 = scmp.ne.s32.totalorder %s109, %s112
    %p121 = scmp.eq.s32.totalorder %s15, 1
    %p122 = por %p120, %p121
    %p123 = scmp.ne.s32.totalorder %s112, %s113
    %p124 = scmp.eq.s32.totalorder %s15, 0
    %p125 = por %p123, %p124
    %p126 = scmp.ne.s32.totalorder %s112, %s113
    %p127 = scmp.eq.s32.totalorder %s16, 1
    %p128 = por %p126, %p127
    %p130 = scmp.ne.s32.totalorder %s113, %s129
    %p131 = scmp.eq.s32.totalorder %s16, 0
    %p132 = por %p130, %p131
    %p133 = scmp.le.s32.totalorder 1, %s10
    %p134 = scmp.lt.s32.totalorder %s10, 3
    %p135 = pnand %p133, %p134
    %p136 = pneg %p135
    // Predicated region
    $region9: #{conv_bn_relu.3} parent=5 // pred_check
      _
    $region10: #{conv_bn_relu.3} parent=5 // pred_check_branch
      %138 = sbr.rel (%p135) target = $region12
    $region11: #{conv_bn_relu.3} parent=5 // pred_region
      %s139 = ssub.s32 %s10, 1
      // Predicated region
      $region13: #{conv_bn_relu.3} parent=11 // pred_check
        %p140 = pneg %p57
      $region14: #{conv_bn_relu.3} parent=11 // pred_check_branch
        %142 = sbr.rel (%p140) target = $region16
      $region15: #{conv_bn_relu.3} parent=11 // pred_region
        _
      $region16: #{conv_bn_relu.3} parent=11 // pred_fallthru
        _
      // Predicated region
      $region17: #{conv_bn_relu.3} parent=11 // pred_check
        %p143 = pneg %p78
      $region18: #{conv_bn_relu.3} parent=11 // pred_check_branch
        %145 = sbr.rel (%p143) target = $region20
      $region19: #{conv_bn_relu.3} parent=11 // pred_region
        _
      $region20: #{conv_bn_relu.3} parent=11 // pred_fallthru
        _
      // Predicated region
      $region21: #{conv_bn_relu.3} parent=11 // pred_check
        %p146 = pneg %p99
      $region22: #{conv_bn_relu.3} parent=11 // pred_check_branch
        %148 = sbr.rel (%p146) target = $region24
      $region23: #{conv_bn_relu.3} parent=11 // pred_region
        _
      $region24: #{conv_bn_relu.3} parent=11 // pred_fallthru
        _
    $region12: #{conv_bn_relu.3} parent=5 // pred_fallthru
      _
    %p149 = scmp.lt.s32.totalorder %s10, 2
    // Predicated region
    $region25: #{conv_bn_relu.3} parent=5 // pred_check
      %p150 = pneg %p149
    $region26: #{conv_bn_relu.3} parent=5 // pred_check_branch
      %152 = sbr.rel (%p150) target = $region28
    $region27: #{conv_bn_relu.3} parent=5 // pred_region
      // Predicated region
      $region29: #{conv_bn_relu.3} parent=27 // pred_check
        %p153 = pneg %p30
      $region30: #{conv_bn_relu.3} parent=27 // pred_check_branch
        %155 = sbr.rel (%p153) target = $region32
      $region31: #{conv_bn_relu.3} parent=27 // pred_region
        %s156 = smul.u32 32, %s10
        %p157 = scmp.lt.s32.totalorder %s156, 63
        %s158 = scalar_select %p157, %s156, 63
        %s159 = smul.addr %s158, 4
        %s160 = scalar_lea.vmem %s0, %s159
        %s161 = smul.u32 32, %s10
      $region32: #{conv_bn_relu.3} parent=27 // pred_fallthru
        _
    $region28: #{conv_bn_relu.3} parent=5 // pred_fallthru
      _
    %p162 = scmp.le.s32.totalorder 1, %s10
    %p163 = scmp.lt.s32.totalorder %s10, 3
    %p164 = pnand %p162, %p163
    %p165 = pneg %p164
    // Predicated region
    $region33: #{conv_bn_relu.3} parent=5 // pred_check
      _
    $region34: #{conv_bn_relu.3} parent=5 // pred_check_branch
      %167 = sbr.rel (%p164) target = $region36
    $region35: #{conv_bn_relu.3} parent=5 // pred_region
      %s168 = ssub.s32 %s10, 1
      %s169 = smul.u32 32, %s15
      %p170 = scmp.lt.s32.totalorder %s169, 63
      %s171 = scalar_select %p170, %s169, 63
      %s172 = smul.addr %s171, 4
      %s173 = scalar_lea.vmem %s0, %s172
      %p174 = pneg %p36
      %p175 = pneg %p33
      %p176 = pneg %p57
      %p177 = pneg %p54
      %p178 = pneg %p78
      %p179 = pneg %p75
      %p180 = pneg %p99
      %p181 = pneg %p96
      %p182 = pneg %p125
      %p183 = pneg %p122
      %s184 = smul.u32 32, %s15
      %p185 = scmp.lt.s32.totalorder %s184, 63
      %s186 = scalar_select %p185, %s184, 63
      %s187 = smul.addr %s186, 8
      %s188 = scalar_lea.vmem %s4, %s187
      %s189 = smul.u32 32, %s15
      %p190 = scmp.lt.s32.totalorder %s189, 63
      %s191 = scalar_select %p190, %s189, 63
      %s192 = smul.addr %s191, 4
      %s193 = scalar_lea.vmem %s0, %s192
      %s194 = smul.u32 32, %s15
      %s195 = smul.u32 32, %s15
      %p196 = scmp.lt.s32.totalorder %s195, 63
      %s197 = scalar_select %p196, %s195, 63
      %s198 = smul.addr %s197, 8
      %s199 = scalar_lea.vmem %s4, %s198
      %s200 = smul.u32 32, %s15
      %v202 = vld [vmem:[%s193] sm:$0xf]
      %v203 = vld [vmem:[%s193 + $0x4] sm:$0xf]
      %v204 = vld [vmem:[%s193 + $0x8] sm:$0xf]
      %v205 = vld [vmem:[%s193 + $0xc] sm:$0xf]
      %v206 = vld [vmem:[%s193 + $0x10] sm:$0xf]
      %v207 = vld [vmem:[%s193 + $0x14] sm:$0xf]
      %v208 = vld [vmem:[%s193 + $0x18] sm:$0xf]
      %v209 = vld [vmem:[%s193 + $0x1c] sm:$0xf]
      %v210 = vld [vmem:[%s193 + $0x20] sm:$0xf]
      %v211 = vld [vmem:[%s193 + $0x24] sm:$0xf]
      %v212 = vld [vmem:[%s193 + $0x28] sm:$0xf]
      %v213 = vld [vmem:[%s193 + $0x2c] sm:$0xf]
      %v214 = vld [vmem:[%s193 + $0x30] sm:$0xf]
      %v215 = vld [vmem:[%s193 + $0x34] sm:$0xf]
      %v216 = vld [vmem:[%s193 + $0x38] sm:$0xf]
      %v217 = vld [vmem:[%s193 + $0x3c] sm:$0xf]
      %v218 = vld [vmem:[%s193 + $0x40] sm:$0xf]
      %v219 = vld [vmem:[%s193 + $0x44] sm:$0xf]
      %v220 = vld [vmem:[%s193 + $0x48] sm:$0xf]
      %v221 = vld [vmem:[%s193 + $0x4c] sm:$0xf]
      %v222 = vld [vmem:[%s193 + $0x50] sm:$0xf]
      %v223 = vld [vmem:[%s193 + $0x54] sm:$0xf]
      %v224 = vld [vmem:[%s193 + $0x58] sm:$0xf]
      %v225 = vld [vmem:[%s193 + $0x5c] sm:$0xf]
      %v226 = vld [vmem:[%s193 + $0x60] sm:$0xf]
      %v227 = vld [vmem:[%s193 + $0x64] sm:$0xf]
      %v228 = vld [vmem:[%s193 + $0x68] sm:$0xf]
      %v229 = vld [vmem:[%s193 + $0x6c] sm:$0xf]
      %v230 = vld [vmem:[%s193 + $0x70] sm:$0xf]
      %v231 = vld [vmem:[%s193 + $0x74] sm:$0xf]
      %v232 = vld [vmem:[%s193 + $0x78] sm:$0xf]
      %v233 = vld [vmem:[%s193 + $0x7c] sm:$0xf]
      %v234 = vld [vmem:[%s1] sm:$0xf]
      %v235 = vld [vmem:[%s1 + $0x4] sm:$0xf]
      %v236 = vld [vmem:[%s1 + $0x8] sm:$0xf]
      %v237 = vld [vmem:[%s1 + $0xc] sm:$0xf]
      %v238 = vld [vmem:[%s1 + $0x10] sm:$0xf]
      %v239 = vld [vmem:[%s1 + $0x14] sm:$0xf]
      %v272 = vunpack.c.l.b16 %v202
      %v273 = vunpack.c.l.b16 %v203
      %v274 = vunpack.c.l.b16 %v204
      %v275 = vunpack.c.l.b16 %v205
      %v276 = vunpack.c.l.b16 %v206
      %v277 = vunpack.c.l.b16 %v207
      %v278 = vunpack.c.l.b16 %v208
      %v279 = vunpack.c.l.b16 %v209
      %v280 = vunpack.c.l.b16 %v210
      %v281 = vunpack.c.l.b16 %v211
      %v282 = vunpack.c.l.b16 %v212
      %v283 = vunpack.c.l.b16 %v213
      %v284 = vunpack.c.l.b16 %v214
      %v285 = vunpack.c.l.b16 %v215
      %v286 = vunpack.c.l.b16 %v216
      %v287 = vunpack.c.l.b16 %v217
      %v288 = vunpack.c.l.b16 %v218
      %v289 = vunpack.c.l.b16 %v219
      %v290 = vunpack.c.l.b16 %v220
      %v291 = vunpack.c.l.b16 %v221
      %v292 = vunpack.c.l.b16 %v222
      %v293 = vunpack.c.l.b16 %v223
      %v294 = vunpack.c.l.b16 %v224
      %v295 = vunpack.c.l.b16 %v225
      %v296 = vunpack.c.l.b16 %v226
      %v297 = vunpack.c.l.b16 %v227
      %v298 = vunpack.c.l.b16 %v228
      %v299 = vunpack.c.l.b16 %v229
      %v300 = vunpack.c.l.b16 %v230
      %v301 = vunpack.c.l.b16 %v231
      %v302 = vunpack.c.l.b16 %v232
      %v303 = vunpack.c.l.b16 %v233
      %v304 = vpack.c.b16 %v273, %v272
      %v305 = vpack.c.b16 %v275, %v274
      %v306 = vpack.c.b16 %v277, %v276
      %v307 = vpack.c.b16 %v279, %v278
      %v308 = vpack.c.b16 %v281, %v280
      %v309 = vpack.c.b16 %v283, %v282
      %v310 = vpack.c.b16 %v285, %v284
      %v311 = vpack.c.b16 %v287, %v286
      %v312 = vpack.c.b16 %v289, %v288
      %v313 = vpack.c.b16 %v291, %v290
      %v314 = vpack.c.b16 %v293, %v292
      %v315 = vpack.c.b16 %v295, %v294
      %v316 = vpack.c.b16 %v297, %v296
      %v317 = vpack.c.b16 %v299, %v298
      %v318 = vpack.c.b16 %v301, %v300
      %v319 = vpack.c.b16 %v303, %v302
      %v326 = vunpack.c.l.b16 %v234
      %v327 = vunpack.c.l.b16 %v235
      %v328 = vunpack.c.l.b16 %v236
      %v329 = vunpack.c.l.b16 %v237
      %v330 = vunpack.c.l.b16 %v238
      %v331 = vunpack.c.l.b16 %v239
      %v332 = vpack.c.b16 %v327, %v326
      %v333 = vpack.c.b16 %v329, %v328
      %v334 = vpack.c.b16 %v331, %v330
      %vm338 = vcmask 392192
      %v340 = vsel %vm338, %v304, 0
      %v343 = vsel %vm338, %v305, 0
      %v346 = vsel %vm338, %v306, 0
      %v349 = vsel %vm338, %v307, 0
      %v352 = vsel %vm338, %v308, 0
      %v355 = vsel %vm338, %v309, 0
      %v358 = vsel %vm338, %v310, 0
      %v361 = vsel %vm338, %v311, 0
      %v364 = vsel %vm338, %v312, 0
      %v367 = vsel %vm338, %v313, 0
      %v370 = vsel %vm338, %v314, 0
      %v373 = vsel %vm338, %v315, 0
      %v376 = vsel %vm338, %v316, 0
      %v379 = vsel %vm338, %v317, 0
      %v382 = vsel %vm338, %v318, 0
      %v385 = vsel %vm338, %v319, 0
      %387 = vmatprep.subr.bf16.mxu0 0
      %388 = vmatpush1.bf16.msra.mxu0 0
      %389 = vmatprep.subr.bf16.mxu0 0
      %390 = vmatpush1.bf16.msra.mxu0 0
      %391 = vmatprep.subr.bf16.mxu0 0
      %392 = vmatpush1.bf16.msra.mxu0 0
      %393 = vmatprep.subr.bf16.mxu0 0
      %394 = vmatpush1.bf16.msra.mxu0 0
      %395 = vmatprep.subr.bf16.mxu0 0
      %396 = vmatpush1.bf16.msra.mxu0 0
      %397 = vmatprep.subr.bf16.mxu0 0
      %398 = vmatpush1.bf16.msra.mxu0 %v334
      %399 = vmatprep.subr.bf16.mxu0 0
      %400 = vmatpush1.bf16.msra.mxu0 %v333
      %401 = vmatprep.subr.bf16.mxu0 0
      %402 = vmatpush1.bf16.msra.mxu0 %v332
      %403 = vmatprep.subr.bf16.mxu0 0
      %404 = vmatpush2.bf16.msra.mxu0 0
      %405 = vmatprep.subr.bf16.mxu0 0
      %406 = vmatpush2.bf16.msra.mxu0 0
      %407 = vmatprep.subr.bf16.mxu0 0
      %408 = vmatpush2.bf16.msra.mxu0 0
      %409 = vmatprep.subr.bf16.mxu0 0
      %410 = vmatpush2.bf16.msra.mxu0 0
      %411 = vmatprep.subr.bf16.mxu0 0
      %412 = vmatpush2.bf16.msra.mxu0 0
      %413 = vmatprep.subr.bf16.mxu0 0
      %414 = vmatpush2.bf16.msra.mxu0 0
      %415 = vmatprep.subr.bf16.mxu0 0
      %416 = vmatpush2.bf16.msra.mxu0 0
      %417 = vmatprep.subr.bf16.mxu0 0
      %418 = vmatpush2.bf16.msra.mxu0 0
      %419 = vmatprep.mubr.bf16.mxu0 0
      %420 = vmatmul.mubr.bf16.gmra.mxu0 %v340
      %v421 = vpop.f32.mrf.mxu0
      %v422 = vadd.f32 0.0, %v421
      %v423 = vpop.f32.mrf.mxu0
      %v424 = vpop.f32.mrf.mxu0
      %v425 = vadd.f32 0.0, %v424
      %v426 = vpop.f32.mrf.mxu0
      %427 = vmatprep.mubr.bf16.mxu0 0
      %428 = vmatmul.mubr.bf16.gmra.mxu0 %v343
      %v429 = vpop.f32.mrf.mxu0
      %v430 = vadd.f32 0.0, %v429
      %v431 = vpop.f32.mrf.mxu0
      %v432 = vpop.f32.mrf.mxu0
      %v433 = vadd.f32 0.0, %v432
      %v434 = vpop.f32.mrf.mxu0
      %435 = vmatprep.mubr.bf16.mxu0 0
      %436 = vmatmul.mubr.bf16.gmra.mxu0 %v346
      %v437 = vpop.f32.mrf.mxu0
      %v438 = vadd.f32 0.0, %v437
      %v439 = vpop.f32.mrf.mxu0
      %v440 = vpop.f32.mrf.mxu0
      %v441 = vadd.f32 0.0, %v440
      %v442 = vpop.f32.mrf.mxu0
      %443 = vmatprep.mubr.bf16.mxu0 0
      %444 = vmatmul.mubr.bf16.gmra.mxu0 %v349
      %v445 = vpop.f32.mrf.mxu0
      %v446 = vadd.f32 0.0, %v445
      %v447 = vpop.f32.mrf.mxu0
      %v448 = vpop.f32.mrf.mxu0
      %v449 = vadd.f32 0.0, %v448
      %v450 = vpop.f32.mrf.mxu0
      %451 = vmatprep.mubr.bf16.mxu0 0
      %452 = vmatmul.mubr.bf16.gmra.mxu0 %v352
      %v453 = vpop.f32.mrf.mxu0
      %v454 = vadd.f32 0.0, %v453
      %v455 = vpop.f32.mrf.mxu0
      %v456 = vpop.f32.mrf.mxu0
      %v457 = vadd.f32 0.0, %v456
      %v458 = vpop.f32.mrf.mxu0
      %459 = vmatprep.mubr.bf16.mxu0 0
      %460 = vmatmul.mubr.bf16.gmra.mxu0 %v355
      %v461 = vpop.f32.mrf.mxu0
      %v462 = vadd.f32 0.0, %v461
      %v463 = vpop.f32.mrf.mxu0
      %v464 = vpop.f32.mrf.mxu0
      %v465 = vadd.f32 0.0, %v464
      %v466 = vpop.f32.mrf.mxu0
      %467 = vmatprep.mubr.bf16.mxu0 0
      %468 = vmatmul.mubr.bf16.gmra.mxu0 %v358
      %v469 = vpop.f32.mrf.mxu0
      %v470 = vadd.f32 0.0, %v469
      %v471 = vpop.f32.mrf.mxu0
      %v472 = vpop.f32.mrf.mxu0
      %v473 = vadd.f32 0.0, %v472
      %v474 = vpop.f32.mrf.mxu0
      %475 = vmatprep.mubr.bf16.mxu0 0
      %476 = vmatmul.mubr.bf16.gmra.mxu0 %v361
      %v477 = vpop.f32.mrf.mxu0
      %v478 = vadd.f32 0.0, %v477
      %v479 = vpop.f32.mrf.mxu0
      %v480 = vpop.f32.mrf.mxu0
      %v481 = vadd.f32 0.0, %v480
      %v482 = vpop.f32.mrf.mxu0
      %483 = vmatprep.mubr.bf16.mxu0 0
      %484 = vmatmul.mubr.bf16.gmra.mxu0 %v364
      %v485 = vpop.f32.mrf.mxu0
      %v486 = vadd.f32 0.0, %v485
      %v487 = vpop.f32.mrf.mxu0
      %v488 = vpop.f32.mrf.mxu0
      %v489 = vadd.f32 0.0, %v488
      %v490 = vpop.f32.mrf.mxu0
      %491 = vmatprep.mubr.bf16.mxu0 0
      %492 = vmatmul.mubr.bf16.gmra.mxu0 %v367
      %v493 = vpop.f32.mrf.mxu0
      %v494 = vadd.f32 0.0, %v493
      %v495 = vpop.f32.mrf.mxu0
      %v496 = vpop.f32.mrf.mxu0
      %v497 = vadd.f32 0.0, %v496
      %v498 = vpop.f32.mrf.mxu0
      %499 = vmatprep.mubr.bf16.mxu0 0
      %500 = vmatmul.mubr.bf16.gmra.mxu0 %v370
      %v501 = vpop.f32.mrf.mxu0
      %v502 = vadd.f32 0.0, %v501
      %v503 = vpop.f32.mrf.mxu0
      %v504 = vpop.f32.mrf.mxu0
      %v505 = vadd.f32 0.0, %v504
      %v506 = vpop.f32.mrf.mxu0
      %507 = vmatprep.mubr.bf16.mxu0 0
      %508 = vmatmul.mubr.bf16.gmra.mxu0 %v373
      %v509 = vpop.f32.mrf.mxu0
      %v510 = vadd.f32 0.0, %v509
      %v511 = vpop.f32.mrf.mxu0
      %v512 = vpop.f32.mrf.mxu0
      %v513 = vadd.f32 0.0, %v512
      %v514 = vpop.f32.mrf.mxu0
      %515 = vmatprep.mubr.bf16.mxu0 0
      %516 = vmatmul.mubr.bf16.gmra.mxu0 %v376
      %v517 = vpop.f32.mrf.mxu0
      %v518 = vadd.f32 0.0, %v517
      %v519 = vpop.f32.mrf.mxu0
      %v520 = vpop.f32.mrf.mxu0
      %v521 = vadd.f32 0.0, %v520
      %v522 = vpop.f32.mrf.mxu0
      %523 = vmatprep.mubr.bf16.mxu0 0
      %524 = vmatmul.mubr.bf16.gmra.mxu0 %v379
      %v525 = vpop.f32.mrf.mxu0
      %v526 = vadd.f32 0.0, %v525
      %v527 = vpop.f32.mrf.mxu0
      %v528 = vpop.f32.mrf.mxu0
      %v529 = vadd.f32 0.0, %v528
      %v530 = vpop.f32.mrf.mxu0
      %531 = vmatprep.mubr.bf16.mxu0 0
      %532 = vmatmul.mubr.bf16.gmra.mxu0 %v382
      %v533 = vpop.f32.mrf.mxu0
      %v534 = vadd.f32 0.0, %v533
      %v535 = vpop.f32.mrf.mxu0
      %v536 = vpop.f32.mrf.mxu0
      %v537 = vadd.f32 0.0, %v536
      %v538 = vpop.f32.mrf.mxu0
      %539 = vmatprep.mubr.bf16.mxu0 0
      %540 = vmatmul.mubr.bf16.gmra.mxu0 %v385
      %v541 = vpop.f32.mrf.mxu0
      %v542 = vadd.f32 0.0, %v541
      %v543 = vpop.f32.mrf.mxu0
      %v544 = vpop.f32.mrf.mxu0
      %v545 = vadd.f32 0.0, %v544
      %v546 = vpop.f32.mrf.mxu0
      %547 = vdwg.mxu0
      %v548 = vld [vmem:[%s2] sm:$0x1]
      %v550 = vlaneseq
      %v551 = vshrl.u32 %v550, 7
      %v552 = vsub.s32 0, %v551
      %v553 = vrot.slane %v548, %v552
      %v555 = vmul.f32 %v422, %v553
      %v556 = vmul.f32 %v425, %v553
      %v557 = vmul.f32 %v430, %v553
      %v558 = vmul.f32 %v433, %v553
      %v559 = vmul.f32 %v438, %v553
      %v560 = vmul.f32 %v441, %v553
      %v561 = vmul.f32 %v446, %v553
      %v562 = vmul.f32 %v449, %v553
      %v563 = vmul.f32 %v454, %v553
      %v564 = vmul.f32 %v457, %v553
      %v565 = vmul.f32 %v462, %v553
      %v566 = vmul.f32 %v465, %v553
      %v567 = vmul.f32 %v470, %v553
      %v568 = vmul.f32 %v473, %v553
      %v569 = vmul.f32 %v478, %v553
      %v570 = vmul.f32 %v481, %v553
      %v571 = vmul.f32 %v486, %v553
      %v572 = vmul.f32 %v489, %v553
      %v573 = vmul.f32 %v494, %v553
      %v574 = vmul.f32 %v497, %v553
      %v575 = vmul.f32 %v502, %v553
      %v576 = vmul.f32 %v505, %v553
      %v577 = vmul.f32 %v510, %v553
      %v578 = vmul.f32 %v513, %v553
      %v579 = vmul.f32 %v518, %v553
      %v580 = vmul.f32 %v521, %v553
      %v581 = vmul.f32 %v526, %v553
      %v582 = vmul.f32 %v529, %v553
      %v583 = vmul.f32 %v534, %v553
      %v584 = vmul.f32 %v537, %v553
      %v585 = vmul.f32 %v542, %v553
      %v586 = vmul.f32 %v545, %v553
      %v587 = vld [vmem:[%s3] sm:$0x1]
      %v589 = vlaneseq
      %v590 = vshrl.u32 %v589, 7
      %v591 = vsub.s32 0, %v590
      %v592 = vrot.slane %v587, %v591
      %v594 = vadd.f32 %v555, %v592
      %v595 = vadd.f32 %v556, %v592
      %v596 = vadd.f32 %v557, %v592
      %v597 = vadd.f32 %v558, %v592
      %v598 = vadd.f32 %v559, %v592
      %v599 = vadd.f32 %v560, %v592
      %v600 = vadd.f32 %v561, %v592
      %v601 = vadd.f32 %v562, %v592
      %v602 = vadd.f32 %v563, %v592
      %v603 = vadd.f32 %v564, %v592
      %v604 = vadd.f32 %v565, %v592
      %v605 = vadd.f32 %v566, %v592
      %v606 = vadd.f32 %v567, %v592
      %v607 = vadd.f32 %v568, %v592
      %v608 = vadd.f32 %v569, %v592
      %v609 = vadd.f32 %v570, %v592
      %v610 = vadd.f32 %v571, %v592
      %v611 = vadd.f32 %v572, %v592
      %v612 = vadd.f32 %v573, %v592
      %v613 = vadd.f32 %v574, %v592
      %v614 = vadd.f32 %v575, %v592
      %v615 = vadd.f32 %v576, %v592
      %v616 = vadd.f32 %v577, %v592
      %v617 = vadd.f32 %v578, %v592
      %v618 = vadd.f32 %v579, %v592
      %v619 = vadd.f32 %v580, %v592
      %v620 = vadd.f32 %v581, %v592
      %v621 = vadd.f32 %v582, %v592
      %v622 = vadd.f32 %v583, %v592
      %v623 = vadd.f32 %v584, %v592
      %v624 = vadd.f32 %v585, %v592
      %v625 = vadd.f32 %v586, %v592
      %v626 = vmax.f32 %v594, 0.0
      %v627 = vmax.f32 %v595, 0.0
      %v628 = vmax.f32 %v596, 0.0
      %v629 = vmax.f32 %v597, 0.0
      %v630 = vmax.f32 %v598, 0.0
      %v631 = vmax.f32 %v599, 0.0
      %v632 = vmax.f32 %v600, 0.0
      %v633 = vmax.f32 %v601, 0.0
      %v634 = vmax.f32 %v602, 0.0
      %v635 = vmax.f32 %v603, 0.0
      %v636 = vmax.f32 %v604, 0.0
      %v637 = vmax.f32 %v605, 0.0
      %v638 = vmax.f32 %v606, 0.0
      %v639 = vmax.f32 %v607, 0.0
      %v640 = vmax.f32 %v608, 0.0
      %v641 = vmax.f32 %v609, 0.0
      %v642 = vmax.f32 %v610, 0.0
      %v643 = vmax.f32 %v611, 0.0
      %v644 = vmax.f32 %v612, 0.0
      %v645 = vmax.f32 %v613, 0.0
      %v646 = vmax.f32 %v614, 0.0
      %v647 = vmax.f32 %v615, 0.0
      %v648 = vmax.f32 %v616, 0.0
      %v649 = vmax.f32 %v617, 0.0
      %v650 = vmax.f32 %v618, 0.0
      %v651 = vmax.f32 %v619, 0.0
      %v652 = vmax.f32 %v620, 0.0
      %v653 = vmax.f32 %v621, 0.0
      %v654 = vmax.f32 %v622, 0.0
      %v655 = vmax.f32 %v623, 0.0
      %v656 = vmax.f32 %v624, 0.0
      %v657 = vmax.f32 %v625, 0.0
      %658 = vst [vmem:[%s199] sm:$0xff] %v626
      %659 = vst [vmem:[%s199 + $0x8] sm:$0xff] %v627
      %660 = vst [vmem:[%s199 + $0x10] sm:$0xff] %v628
      %661 = vst [vmem:[%s199 + $0x18] sm:$0xff] %v629
      %662 = vst [vmem:[%s199 + $0x20] sm:$0xff] %v630
      %663 = vst [vmem:[%s199 + $0x28] sm:$0xff] %v631
      %664 = vst [vmem:[%s199 + $0x30] sm:$0xff] %v632
      %665 = vst [vmem:[%s199 + $0x38] sm:$0xff] %v633
      %666 = vst [vmem:[%s199 + $0x40] sm:$0xff] %v634
      %667 = vst [vmem:[%s199 + $0x48] sm:$0xff] %v635
      %668 = vst [vmem:[%s199 + $0x50] sm:$0xff] %v636
      %669 = vst [vmem:[%s199 + $0x58] sm:$0xff] %v637
      %670 = vst [vmem:[%s199 + $0x60] sm:$0xff] %v638
      %671 = vst [vmem:[%s199 + $0x68] sm:$0xff] %v639
      %672 = vst [vmem:[%s199 + $0x70] sm:$0xff] %v640
      %673 = vst [vmem:[%s199 + $0x78] sm:$0xff] %v641
      %674 = vst [vmem:[%s199 + $0x80] sm:$0xff] %v642
      %675 = vst [vmem:[%s199 + $0x88] sm:$0xff] %v643
      %676 = vst [vmem:[%s199 + $0x90] sm:$0xff] %v644
      %677 = vst [vmem:[%s199 + $0x98] sm:$0xff] %v645
      %678 = vst [vmem:[%s199 + $0xa0] sm:$0xff] %v646
      %679 = vst [vmem:[%s199 + $0xa8] sm:$0xff] %v647
      %680 = vst [vmem:[%s199 + $0xb0] sm:$0xff] %v648
      %681 = vst [vmem:[%s199 + $0xb8] sm:$0xff] %v649
      %682 = vst [vmem:[%s199 + $0xc0] sm:$0xff] %v650
      %683 = vst [vmem:[%s199 + $0xc8] sm:$0xff] %v651
      %684 = vst [vmem:[%s199 + $0xd0] sm:$0xff] %v652
      %685 = vst [vmem:[%s199 + $0xd8] sm:$0xff] %v653
      %686 = vst [vmem:[%s199 + $0xe0] sm:$0xff] %v654
      %687 = vst [vmem:[%s199 + $0xe8] sm:$0xff] %v655
      %688 = vst [vmem:[%s199 + $0xf0] sm:$0xff] %v656
      %689 = vst [vmem:[%s199 + $0xf8] sm:$0xff] %v657
      %s690 = smul.u32 32, %s15
      %p691 = scmp.lt.s32.totalorder %s690, 63
      %s692 = scalar_select %p691, %s690, 63
      %s693 = smul.addr %s692, 8
      %s694 = scalar_lea.vmem %s4, %s693
      // Predicated region
      $region37: #{conv_bn_relu.3} parent=35 // pred_check
        %p695 = pneg %p122
      $region38: #{conv_bn_relu.3} parent=35 // pred_check_branch
        %697 = sbr.rel (%p695) target = $region40
      $region39: #{conv_bn_relu.3} parent=35 // pred_region
        %s698 = smul.u32 32, %s15
      $region40: #{conv_bn_relu.3} parent=35 // pred_fallthru
        _
    $region36: #{conv_bn_relu.3} parent=5 // pred_fallthru
      _
    %p699 = scmp.le.s32.totalorder 2, %s10
    // Predicated region
    $region41: #{conv_bn_relu.3} parent=5 // pred_check
      %p700 = pneg %p699
    $region42: #{conv_bn_relu.3} parent=5 // pred_check_branch
      %702 = sbr.rel (%p700) target = $region44
    $region43: #{conv_bn_relu.3} parent=5 // pred_region
      %s703 = ssub.s32 %s10, 2
      // Predicated region
      $region45: #{conv_bn_relu.3} parent=43 // pred_check
        %p704 = pneg %p128
      $region46: #{conv_bn_relu.3} parent=43 // pred_check_branch
        %706 = sbr.rel (%p704) target = $region48
      $region47: #{conv_bn_relu.3} parent=43 // pred_region
        %s707 = smul.u32 32, %s16
        %p708 = scmp.lt.s32.totalorder %s707, 63
        %s709 = scalar_select %p708, %s707, 63
        %s710 = smul.addr %s709, 8
        %s711 = scalar_lea.vmem %s4, %s710
      $region48: #{conv_bn_relu.3} parent=43 // pred_fallthru
        _
    $region44: #{conv_bn_relu.3} parent=5 // pred_fallthru
      _
  $region6: #{conv_bn_relu.3} parent=0 // loop_footer
    %s14 = sadd.s32 1, %s10
  $region7: #{conv_bn_relu.3} parent=0 // loop_footer_branch
    %9 = sbr.rel target = $region3
  $region8: #{conv_bn_relu.3} parent=0 // loop_exit
    _

// kernel: conv_bn_relu.2
$region0: #{conv_bn_relu.2}
  #allocation0 [shape = 'u32[]', space=smem, size = 0x4, offset = 0x4, fixed_abs, tag = 'smem constant byte address 0x4 - core index']
  #allocation1 [shape = 'u32[144,128]{1,0:T(1,128)}', space=vmem, size = 0x12000, scoped, tag = 'internal scratch']
  %s0 = inlined_call_operand.vmem [shape: bf16[512,48], index: 0, kind: input, shape index: {}]
  %s1 = inlined_call_operand.vmem [shape: bf16[48,128], index: 1, kind: input, shape index: {}]
  %s2 = inlined_call_operand.vmem [shape: f32[1,128], index: 2, kind: output, shape index: {0}]
  %s3 = inlined_call_operand.vmem [shape: f32[1,128], index: 3, kind: output, shape index: {1}]
  %4 = xla_tuple %s2, %s3
  %s5 = sld [smem:[#allocation0]]
  $region53: #{conv_bn_relu.2} parent=0
    _
  %s7 = ssub.s32 1, %s5
  %s8 = scalar_select 0, %s7, %s5
  loop: start=0, step=1, limit=4
  $region2: #{conv_bn_relu.2} parent=0 // loop_pre_header
    _
  $region3: #{conv_bn_relu.2} parent=0 // loop_header
    %s10 = sphi 0, %s14
    %p11 = scmp.ge.s32.totalorder %s10, 4
    %s20 = sphi 0, %s22
    %s23 = sphi 0, %s20
    %s24 = sphi 0, %s23
    %s40 = sphi 0, %s24
    %s44 = sphi 0, %s44
    %s46 = sphi 0, %s44
    %s47 = sphi 0, %s46
    %s61 = sphi 0, %s47
    %s65 = sphi 0, %s65
    %s67 = sphi 0, %s65
    %s68 = sphi 0, %s67
    %s82 = sphi 0, %s68
    %s86 = sphi 0, %s86
    %s88 = sphi 0, %s86
    %s89 = sphi 0, %s88
    %s103 = sphi 0, %s89
  $region4: #{conv_bn_relu.2} parent=0 // loop_header_branch
    %13 = sbr.rel (%p11) target = $region8
  $region5: #{conv_bn_relu.2} parent=0 // loop_body
    %s15 = ssub.s32 %s10, 1
    %s16 = ssub.s32 %s10, 2
    %s17 = sadd.s32 %s10, 1
    %s18 = ssub.s32 %s10, %s17
    %p19 = scmp.eq.s32.totalorder %s18, 0
    %s21 = sadd.s32 %s20, 1
    %s22 = scalar_select %p19, %s20, %s21
    %p25 = pneg %p19
    %p26 = scmp.eq.s32.totalorder %s10, 1
    %p27 = por %p25, %p26
    %p28 = scmp.ne.s32.totalorder %s20, %s23
    %p29 = scmp.eq.s32.totalorder %s10, 0
    %p30 = por %p28, %p29
    %p31 = scmp.ne.s32.totalorder %s20, %s23
    %p32 = scmp.eq.s32.totalorder %s15, 1
    %p33 = por %p31, %p32
    %p34 = scmp.ne.s32.totalorder %s23, %s24
    %p35 = scmp.eq.s32.totalorder %s15, 0
    %p36 = por %p34, %p35
    %p37 = scmp.ne.s32.totalorder %s23, %s24
    %p38 = scmp.eq.s32.totalorder %s16, 1
    %p39 = por %p37, %p38
    %p41 = scmp.ne.s32.totalorder %s24, %s40
    %p42 = scmp.eq.s32.totalorder %s16, 0
    %p43 = por %p41, %p42
    %s45 = sadd.s32 %s44, 1
    %p48 = scmp.eq.s32.totalorder %s10, 1
    %p49 = scmp.ne.s32.totalorder %s44, %s46
    %p50 = scmp.eq.s32.totalorder %s10, 0
    %p51 = por %p49, %p50
    %p52 = scmp.ne.s32.totalorder %s44, %s46
    %p53 = scmp.eq.s32.totalorder %s15, 1
    %p54 = por %p52, %p53
    %p55 = scmp.ne.s32.totalorder %s46, %s47
    %p56 = scmp.eq.s32.totalorder %s15, 0
    %p57 = por %p55, %p56
    %p58 = scmp.ne.s32.totalorder %s46, %s47
    %p59 = scmp.eq.s32.totalorder %s16, 1
    %p60 = por %p58, %p59
    %p62 = scmp.ne.s32.totalorder %s47, %s61
    %p63 = scmp.eq.s32.totalorder %s16, 0
    %p64 = por %p62, %p63
    %s66 = sadd.s32 %s65, 1
    %p69 = scmp.eq.s32.totalorder %s10, 1
    %p70 = scmp.ne.s32.totalorder %s65, %s67
    %p71 = scmp.eq.s32.totalorder %s10, 0
    %p72 = por %p70, %p71
    %p73 = scmp.ne.s32.totalorder %s65, %s67
    %p74 = scmp.eq.s32.totalorder %s15, 1
    %p75 = por %p73, %p74
    %p76 = scmp.ne.s32.totalorder %s67, %s68
    %p77 = scmp.eq.s32.totalorder %s15, 0
    %p78 = por %p76, %p77
    %p79 = scmp.ne.s32.totalorder %s67, %s68
    %p80 = scmp.eq.s32.totalorder %s16, 1
    %p81 = por %p79, %p80
    %p83 = scmp.ne.s32.totalorder %s68, %s82
    %p84 = scmp.eq.s32.totalorder %s16, 0
    %p85 = por %p83, %p84
    %s87 = sadd.s32 %s86, 1
    %p90 = scmp.eq.s32.totalorder %s10, 1
    %p91 = scmp.ne.s32.totalorder %s86, %s88
    %p92 = scmp.eq.s32.totalorder %s10, 0
    %p93 = por %p91, %p92
    %p94 = scmp.ne.s32.totalorder %s86, %s88
    %p95 = scmp.eq.s32.totalorder %s15, 1
    %p96 = por %p94, %p95
    %p97 = scmp.ne.s32.totalorder %s88, %s89
    %p98 = scmp.eq.s32.totalorder %s15, 0
    %p99 = por %p97, %p98
    %p100 = scmp.ne.s32.totalorder %s88, %s89
    %p101 = scmp.eq.s32.totalorder %s16, 1
    %p102 = por %p100, %p101
    %p104 = scmp.ne.s32.totalorder %s89, %s103
    %p105 = scmp.eq.s32.totalorder %s16, 0
    %p106 = por %p104, %p105
    %p107 = scmp.le.s32.totalorder 1, %s10
    %p108 = scmp.lt.s32.totalorder %s10, 3
    %p109 = pnand %p107, %p108
    %p110 = pneg %p109
    // Predicated region
    $region9: #{conv_bn_relu.2} parent=5 // pred_check
      _
    $region10: #{conv_bn_relu.2} parent=5 // pred_check_branch
      %112 = sbr.rel (%p109) target = $region12
    $region11: #{conv_bn_relu.2} parent=5 // pred_region
      %s113 = ssub.s32 %s10, 1
      // Predicated region
      $region13: #{conv_bn_relu.2} parent=11 // pred_check
        %p114 = pneg %p57
      $region14: #{conv_bn_relu.2} parent=11 // pred_check_branch
        %116 = sbr.rel (%p114) target = $region16
      $region15: #{conv_bn_relu.2} parent=11 // pred_region
        _
      $region16: #{conv_bn_relu.2} parent=11 // pred_fallthru
        _
    $region12: #{conv_bn_relu.2} parent=5 // pred_fallthru
      _
    %p117 = scmp.lt.s32.totalorder %s10, 2
    // Predicated region
    $region17: #{conv_bn_relu.2} parent=5 // pred_check
      %p118 = pneg %p117
    $region18: #{conv_bn_relu.2} parent=5 // pred_check_branch
      %120 = sbr.rel (%p118) target = $region20
    $region19: #{conv_bn_relu.2} parent=5 // pred_region
      // Predicated region
      $region21: #{conv_bn_relu.2} parent=19 // pred_check
        %p121 = pneg %p30
      $region22: #{conv_bn_relu.2} parent=19 // pred_check_branch
        %123 = sbr.rel (%p121) target = $region24
      $region23: #{conv_bn_relu.2} parent=19 // pred_region
        %s124 = smul.u32 32, %s10
        %p125 = scmp.lt.s32.totalorder %s124, 63
        %s126 = scalar_select %p125, %s124, 63
        %s127 = smul.addr %s126, 4
        %s128 = scalar_lea.vmem %s0, %s127
        %s129 = smul.u32 32, %s10
      $region24: #{conv_bn_relu.2} parent=19 // pred_fallthru
        _
    $region20: #{conv_bn_relu.2} parent=5 // pred_fallthru
      _
    %p130 = scmp.le.s32.totalorder 1, %s10
    %p131 = scmp.lt.s32.totalorder %s10, 3
    %p132 = pnand %p130, %p131
    %p133 = pneg %p132
    // Predicated region
    $region25: #{conv_bn_relu.2} parent=5 // pred_check
      _
    $region26: #{conv_bn_relu.2} parent=5 // pred_check_branch
      %135 = sbr.rel (%p132) target = $region28
    $region27: #{conv_bn_relu.2} parent=5 // pred_region
      %s136 = ssub.s32 %s10, 1
      %s137 = smul.u32 32, %s15
      %p138 = scmp.lt.s32.totalorder %s137, 63
      %s139 = scalar_select %p138, %s137, 63
      %s140 = smul.addr %s139, 4
      %s141 = scalar_lea.vmem %s0, %s140
      %p142 = pneg %p36
      %p143 = pneg %p33
      %p144 = pneg %p57
      %p145 = pneg %p54
      %p146 = pneg %p78
      %p147 = pneg %p75
      %p148 = pneg %p99
      %p149 = pneg %p96
      %s150 = smul.u32 32, %s15
      %p151 = scmp.lt.s32.totalorder %s150, 63
      %s152 = scalar_select %p151, %s150, 63
      %s153 = smul.addr %s152, 4
      %s154 = scalar_lea.vmem %s0, %s153
      %s155 = smul.u32 32, %s15
      %p157 = scmp.eq.s32.totalorder %s15, 0
      // Predicated region
      $region29: #{conv_bn_relu.2} parent=27 // pred_check
        %p158 = pneg %p157
      $region30: #{conv_bn_relu.2} parent=27 // pred_check_branch
        %160 = sbr.rel (%p158) target = $region32
      $region31: #{conv_bn_relu.2} parent=27 // pred_region
        %161 = vst [vmem:[%s2] sm:$0x1] 0.0
        %162 = vst [vmem:[%s3] sm:$0x1] 0.0
      $region32: #{conv_bn_relu.2} parent=27 // pred_fallthru
        _
      %v163 = vld [vmem:[%s154] sm:$0xf]
      %v164 = vld [vmem:[%s154 + $0x4] sm:$0xf]
      %v165 = vld [vmem:[%s154 + $0x8] sm:$0xf]
      %v166 = vld [vmem:[%s154 + $0xc] sm:$0xf]
      %v167 = vld [vmem:[%s154 + $0x10] sm:$0xf]
      %v168 = vld [vmem:[%s154 + $0x14] sm:$0xf]
      %v169 = vld [vmem:[%s154 + $0x18] sm:$0xf]
      %v170 = vld [vmem:[%s154 + $0x1c] sm:$0xf]
      %v171 = vld [vmem:[%s154 + $0x20] sm:$0xf]
      %v172 = vld [vmem:[%s154 + $0x24] sm:$0xf]
      %v173 = vld [vmem:[%s154 + $0x28] sm:$0xf]
      %v174 = vld [vmem:[%s154 + $0x2c] sm:$0xf]
      %v175 = vld [vmem:[%s154 + $0x30] sm:$0xf]
      %v176 = vld [vmem:[%s154 + $0x34] sm:$0xf]
      %v177 = vld [vmem:[%s154 + $0x38] sm:$0xf]
      %v178 = vld [vmem:[%s154 + $0x3c] sm:$0xf]
      %v179 = vld [vmem:[%s154 + $0x40] sm:$0xf]
      %v180 = vld [vmem:[%s154 + $0x44] sm:$0xf]
      %v181 = vld [vmem:[%s154 + $0x48] sm:$0xf]
      %v182 = vld [vmem:[%s154 + $0x4c] sm:$0xf]
      %v183 = vld [vmem:[%s154 + $0x50] sm:$0xf]
      %v184 = vld [vmem:[%s154 + $0x54] sm:$0xf]
      %v185 = vld [vmem:[%s154 + $0x58] sm:$0xf]
      %v186 = vld [vmem:[%s154 + $0x5c] sm:$0xf]
      %v187 = vld [vmem:[%s154 + $0x60] sm:$0xf]
      %v188 = vld [vmem:[%s154 + $0x64] sm:$0xf]
      %v189 = vld [vmem:[%s154 + $0x68] sm:$0xf]
      %v190 = vld [vmem:[%s154 + $0x6c] sm:$0xf]
      %v191 = vld [vmem:[%s154 + $0x70] sm:$0xf]
      %v192 = vld [vmem:[%s154 + $0x74] sm:$0xf]
      %v193 = vld [vmem:[%s154 + $0x78] sm:$0xf]
      %v194 = vld [vmem:[%s154 + $0x7c] sm:$0xf]
      %v195 = vld [vmem:[%s1] sm:$0xf]
      %v196 = vld [vmem:[%s1 + $0x4] sm:$0xf]
      %v197 = vld [vmem:[%s1 + $0x8] sm:$0xf]
      %v198 = vld [vmem:[%s1 + $0xc] sm:$0xf]
      %v199 = vld [vmem:[%s1 + $0x10] sm:$0xf]
      %v200 = vld [vmem:[%s1 + $0x14] sm:$0xf]
      %v233 = vunpack.c.l.b16 %v163
      %v234 = vunpack.c.l.b16 %v164
      %v235 = vunpack.c.l.b16 %v165
      %v236 = vunpack.c.l.b16 %v166
      %v237 = vunpack.c.l.b16 %v167
      %v238 = vunpack.c.l.b16 %v168
      %v239 = vunpack.c.l.b16 %v169
      %v240 = vunpack.c.l.b16 %v170
      %v241 = vunpack.c.l.b16 %v171
      %v242 = vunpack.c.l.b16 %v172
      %v243 = vunpack.c.l.b16 %v173
      %v244 = vunpack.c.l.b16 %v174
      %v245 = vunpack.c.l.b16 %v175
      %v246 = vunpack.c.l.b16 %v176
      %v247 = vunpack.c.l.b16 %v177
      %v248 = vunpack.c.l.b16 %v178
      %v249 = vunpack.c.l.b16 %v179
      %v250 = vunpack.c.l.b16 %v180
      %v251 = vunpack.c.l.b16 %v181
      %v252 = vunpack.c.l.b16 %v182
      %v253 = vunpack.c.l.b16 %v183
      %v254 = vunpack.c.l.b16 %v184
      %v255 = vunpack.c.l.b16 %v185
      %v256 = vunpack.c.l.b16 %v186
      %v257 = vunpack.c.l.b16 %v187
      %v258 = vunpack.c.l.b16 %v188
      %v259 = vunpack.c.l.b16 %v189
      %v260 = vunpack.c.l.b16 %v190
      %v261 = vunpack.c.l.b16 %v191
      %v262 = vunpack.c.l.b16 %v192
      %v263 = vunpack.c.l.b16 %v193
      %v264 = vunpack.c.l.b16 %v194
      %v265 = vpack.c.b16 %v234, %v233
      %v266 = vpack.c.b16 %v236, %v235
      %v267 = vpack.c.b16 %v238, %v237
      %v268 = vpack.c.b16 %v240, %v239
      %v269 = vpack.c.b16 %v242, %v241
      %v270 = vpack.c.b16 %v244, %v243
      %v271 = vpack.c.b16 %v246, %v245
      %v272 = vpack.c.b16 %v248, %v247
      %v273 = vpack.c.b16 %v250, %v249
      %v274 = vpack.c.b16 %v252, %v251
      %v275 = vpack.c.b16 %v254, %v253
      %v276 = vpack.c.b16 %v256, %v255
      %v277 = vpack.c.b16 %v258, %v257
      %v278 = vpack.c.b16 %v260, %v259
      %v279 = vpack.c.b16 %v262, %v261
      %v280 = vpack.c.b16 %v264, %v263
      %v287 = vunpack.c.l.b16 %v195
      %v288 = vunpack.c.l.b16 %v196
      %v289 = vunpack.c.l.b16 %v197
      %v290 = vunpack.c.l.b16 %v198
      %v291 = vunpack.c.l.b16 %v199
      %v292 = vunpack.c.l.b16 %v200
      %v293 = vpack.c.b16 %v288, %v287
      %v294 = vpack.c.b16 %v290, %v289
      %v295 = vpack.c.b16 %v292, %v291
      %vm299 = vcmask 392192
      %v301 = vsel %vm299, %v265, 0
      %v304 = vsel %vm299, %v266, 0
      %v307 = vsel %vm299, %v267, 0
      %v310 = vsel %vm299, %v268, 0
      %v313 = vsel %vm299, %v269, 0
      %v316 = vsel %vm299, %v270, 0
      %v319 = vsel %vm299, %v271, 0
      %v322 = vsel %vm299, %v272, 0
      %v325 = vsel %vm299, %v273, 0
      %v328 = vsel %vm299, %v274, 0
      %v331 = vsel %vm299, %v275, 0
      %v334 = vsel %vm299, %v276, 0
      %v337 = vsel %vm299, %v277, 0
      %v340 = vsel %vm299, %v278, 0
      %v343 = vsel %vm299, %v279, 0
      %v346 = vsel %vm299, %v280, 0
      %348 = vmatprep.subr.bf16.mxu0 0
      %349 = vmatpush1.bf16.msra.mxu0 0
      %350 = vmatprep.subr.bf16.mxu0 0
      %351 = vmatpush1.bf16.msra.mxu0 0
      %352 = vmatprep.subr.bf16.mxu0 0
      %353 = vmatpush1.bf16.msra.mxu0 0
      %354 = vmatprep.subr.bf16.mxu0 0
      %355 = vmatpush1.bf16.msra.mxu0 0
      %356 = vmatprep.subr.bf16.mxu0 0
      %357 = vmatpush1.bf16.msra.mxu0 0
      %358 = vmatprep.subr.bf16.mxu0 0
      %359 = vmatpush1.bf16.msra.mxu0 %v295
      %360 = vmatprep.subr.bf16.mxu0 0
      %361 = vmatpush1.bf16.msra.mxu0 %v294
      %362 = vmatprep.subr.bf16.mxu0 0
      %363 = vmatpush1.bf16.msra.mxu0 %v293
      %364 = vmatprep.subr.bf16.mxu0 0
      %365 = vmatpush2.bf16.msra.mxu0 0
      %366 = vmatprep.subr.bf16.mxu0 0
      %367 = vmatpush2.bf16.msra.mxu0 0
      %368 = vmatprep.subr.bf16.mxu0 0
      %369 = vmatpush2.bf16.msra.mxu0 0
      %370 = vmatprep.subr.bf16.mxu0 0
      %371 = vmatpush2.bf16.msra.mxu0 0
      %372 = vmatprep.subr.bf16.mxu0 0
      %373 = vmatpush2.bf16.msra.mxu0 0
      %374 = vmatprep.subr.bf16.mxu0 0
      %375 = vmatpush2.bf16.msra.mxu0 0
      %376 = vmatprep.subr.bf16.mxu0 0
      %377 = vmatpush2.bf16.msra.mxu0 0
      %378 = vmatprep.subr.bf16.mxu0 0
      %379 = vmatpush2.bf16.msra.mxu0 0
      %380 = vmatprep.mubr.bf16.mxu0 0
      %381 = vmatmul.mubr.bf16.gmra.mxu0 %v301
      %v382 = vpop.f32.mrf.mxu0
      %v383 = vadd.f32 0.0, %v382
      %v384 = vpop.f32.mrf.mxu0
      %v385 = vpop.f32.mrf.mxu0
      %v386 = vadd.f32 0.0, %v385
      %v387 = vpop.f32.mrf.mxu0
      %388 = vmatprep.mubr.bf16.mxu0 0
      %389 = vmatmul.mubr.bf16.gmra.mxu0 %v304
      %v390 = vpop.f32.mrf.mxu0
      %v391 = vadd.f32 0.0, %v390
      %v392 = vpop.f32.mrf.mxu0
      %v393 = vpop.f32.mrf.mxu0
      %v394 = vadd.f32 0.0, %v393
      %v395 = vpop.f32.mrf.mxu0
      %396 = vmatprep.mubr.bf16.mxu0 0
      %397 = vmatmul.mubr.bf16.gmra.mxu0 %v307
      %v398 = vpop.f32.mrf.mxu0
      %v399 = vadd.f32 0.0, %v398
      %v400 = vpop.f32.mrf.mxu0
      %v401 = vpop.f32.mrf.mxu0
      %v402 = vadd.f32 0.0, %v401
      %v403 = vpop.f32.mrf.mxu0
      %404 = vmatprep.mubr.bf16.mxu0 0
      %405 = vmatmul.mubr.bf16.gmra.mxu0 %v310
      %v406 = vpop.f32.mrf.mxu0
      %v407 = vadd.f32 0.0, %v406
      %v408 = vpop.f32.mrf.mxu0
      %v409 = vpop.f32.mrf.mxu0
      %v410 = vadd.f32 0.0, %v409
      %v411 = vpop.f32.mrf.mxu0
      %412 = vmatprep.mubr.bf16.mxu0 0
      %413 = vmatmul.mubr.bf16.gmra.mxu0 %v313
      %v414 = vpop.f32.mrf.mxu0
      %v415 = vadd.f32 0.0, %v414
      %v416 = vpop.f32.mrf.mxu0
      %v417 = vpop.f32.mrf.mxu0
      %v418 = vadd.f32 0.0, %v417
      %v419 = vpop.f32.mrf.mxu0
      %420 = vmatprep.mubr.bf16.mxu0 0
      %421 = vmatmul.mubr.bf16.gmra.mxu0 %v316
      %v422 = vpop.f32.mrf.mxu0
      %v423 = vadd.f32 0.0, %v422
      %v424 = vpop.f32.mrf.mxu0
      %v425 = vpop.f32.mrf.mxu0
      %v426 = vadd.f32 0.0, %v425
      %v427 = vpop.f32.mrf.mxu0
      %428 = vmatprep.mubr.bf16.mxu0 0
      %429 = vmatmul.mubr.bf16.gmra.mxu0 %v319
      %v430 = vpop.f32.mrf.mxu0
      %v431 = vadd.f32 0.0, %v430
      %v432 = vpop.f32.mrf.mxu0
      %v433 = vpop.f32.mrf.mxu0
      %v434 = vadd.f32 0.0, %v433
      %v435 = vpop.f32.mrf.mxu0
      %436 = vmatprep.mubr.bf16.mxu0 0
      %437 = vmatmul.mubr.bf16.gmra.mxu0 %v322
      %v438 = vpop.f32.mrf.mxu0
      %v439 = vadd.f32 0.0, %v438
      %v440 = vpop.f32.mrf.mxu0
      %v441 = vpop.f32.mrf.mxu0
      %v442 = vadd.f32 0.0, %v441
      %v443 = vpop.f32.mrf.mxu0
      %444 = vmatprep.mubr.bf16.mxu0 0
      %445 = vmatmul.mubr.bf16.gmra.mxu0 %v325
      %v446 = vpop.f32.mrf.mxu0
      %v447 = vadd.f32 0.0, %v446
      %v448 = vpop.f32.mrf.mxu0
      %v449 = vpop.f32.mrf.mxu0
      %v450 = vadd.f32 0.0, %v449
      %v451 = vpop.f32.mrf.mxu0
      %452 = vmatprep.mubr.bf16.mxu0 0
      %453 = vmatmul.mubr.bf16.gmra.mxu0 %v328
      %v454 = vpop.f32.mrf.mxu0
      %v455 = vadd.f32 0.0, %v454
      %v456 = vpop.f32.mrf.mxu0
      %v457 = vpop.f32.mrf.mxu0
      %v458 = vadd.f32 0.0, %v457
      %v459 = vpop.f32.mrf.mxu0
      %460 = vmatprep.mubr.bf16.mxu0 0
      %461 = vmatmul.mubr.bf16.gmra.mxu0 %v331
      %v462 = vpop.f32.mrf.mxu0
      %v463 = vadd.f32 0.0, %v462
      %v464 = vpop.f32.mrf.mxu0
      %v465 = vpop.f32.mrf.mxu0
      %v466 = vadd.f32 0.0, %v465
      %v467 = vpop.f32.mrf.mxu0
      %468 = vmatprep.mubr.bf16.mxu0 0
      %469 = vmatmul.mubr.bf16.gmra.mxu0 %v334
      %v470 = vpop.f32.mrf.mxu0
      %v471 = vadd.f32 0.0, %v470
      %v472 = vpop.f32.mrf.mxu0
      %v473 = vpop.f32.mrf.mxu0
      %v474 = vadd.f32 0.0, %v473
      %v475 = vpop.f32.mrf.mxu0
      %476 = vmatprep.mubr.bf16.mxu0 0
      %477 = vmatmul.mubr.bf16.gmra.mxu0 %v337
      %v478 = vpop.f32.mrf.mxu0
      %v479 = vadd.f32 0.0, %v478
      %v480 = vpop.f32.mrf.mxu0
      %v481 = vpop.f32.mrf.mxu0
      %v482 = vadd.f32 0.0, %v481
      %v483 = vpop.f32.mrf.mxu0
      %484 = vmatprep.mubr.bf16.mxu0 0
      %485 = vmatmul.mubr.bf16.gmra.mxu0 %v340
      %v486 = vpop.f32.mrf.mxu0
      %v487 = vadd.f32 0.0, %v486
      %v488 = vpop.f32.mrf.mxu0
      %v489 = vpop.f32.mrf.mxu0
      %v490 = vadd.f32 0.0, %v489
      %v491 = vpop.f32.mrf.mxu0
      %492 = vmatprep.mubr.bf16.mxu0 0
      %493 = vmatmul.mubr.bf16.gmra.mxu0 %v343
      %v494 = vpop.f32.mrf.mxu0
      %v495 = vadd.f32 0.0, %v494
      %v496 = vpop.f32.mrf.mxu0
      %v497 = vpop.f32.mrf.mxu0
      %v498 = vadd.f32 0.0, %v497
      %v499 = vpop.f32.mrf.mxu0
      %500 = vmatprep.mubr.bf16.mxu0 0
      %501 = vmatmul.mubr.bf16.gmra.mxu0 %v346
      %v502 = vpop.f32.mrf.mxu0
      %v503 = vadd.f32 0.0, %v502
      %v504 = vpop.f32.mrf.mxu0
      %v505 = vpop.f32.mrf.mxu0
      %v506 = vadd.f32 0.0, %v505
      %v507 = vpop.f32.mrf.mxu0
      %508 = vdwg.mxu0
      %v509 = vld [vmem:[%s2] sm:$0x1]
      %v510 = vadd.f32 %v383, %v386
      %v511 = vadd.f32 %v510, %v391
      %v512 = vadd.f32 %v511, %v394
      %v513 = vadd.f32 %v512, %v399
      %v514 = vadd.f32 %v513, %v402
      %v515 = vadd.f32 %v514, %v407
      %v516 = vadd.f32 %v515, %v410
      %v517 = vadd.f32 %v516, %v415
      %v518 = vadd.f32 %v517, %v418
      %v519 = vadd.f32 %v518, %v423
      %v520 = vadd.f32 %v519, %v426
      %v521 = vadd.f32 %v520, %v431
      %v522 = vadd.f32 %v521, %v434
      %v523 = vadd.f32 %v522, %v439
      %v524 = vadd.f32 %v523, %v442
      %v525 = vadd.f32 %v524, %v447
      %v526 = vadd.f32 %v525, %v450
      %v527 = vadd.f32 %v526, %v455
      %v528 = vadd.f32 %v527, %v458
      %v529 = vadd.f32 %v528, %v463
      %v530 = vadd.f32 %v529, %v466
      %v531 = vadd.f32 %v530, %v471
      %v532 = vadd.f32 %v531, %v474
      %v533 = vadd.f32 %v532, %v479
      %v534 = vadd.f32 %v533, %v482
      %v535 = vadd.f32 %v534, %v487
      %v536 = vadd.f32 %v535, %v490
      %v537 = vadd.f32 %v536, %v495
      %v538 = vadd.f32 %v537, %v498
      %v539 = vadd.f32 %v538, %v503
      %v540 = vadd.f32 %v539, %v506
      %v541 = vrot.slane %v540, 4
      %v542 = vadd.f32 %v540, %v541
      %v543 = vrot.slane %v542, 2
      %v544 = vadd.f32 %v542, %v543
      %v545 = vrot.slane %v544, 1
      %v546 = vadd.f32 %v544, %v545
      %v547 = vadd.f32 %v509, %v546
      %548 = vst [vmem:[%s2] sm:$0x1] %v547
      %v549 = vld [vmem:[%s3] sm:$0x1]
      %v550 = vmul.f32 %v383, %v383
      %v551 = vmul.f32 %v386, %v386
      %v552 = vmul.f32 %v391, %v391
      %v553 = vmul.f32 %v394, %v394
      %v554 = vmul.f32 %v399, %v399
      %v555 = vmul.f32 %v402, %v402
      %v556 = vmul.f32 %v407, %v407
      %v557 = vmul.f32 %v410, %v410
      %v558 = vmul.f32 %v415, %v415
      %v559 = vmul.f32 %v418, %v418
      %v560 = vmul.f32 %v423, %v423
      %v561 = vmul.f32 %v426, %v426
      %v562 = vmul.f32 %v431, %v431
      %v563 = vmul.f32 %v434, %v434
      %v564 = vmul.f32 %v439, %v439
      %v565 = vmul.f32 %v442, %v442
      %v566 = vmul.f32 %v447, %v447
      %v567 = vmul.f32 %v450, %v450
      %v568 = vmul.f32 %v455, %v455
      %v569 = vmul.f32 %v458, %v458
      %v570 = vmul.f32 %v463, %v463
      %v571 = vmul.f32 %v466, %v466
      %v572 = vmul.f32 %v471, %v471
      %v573 = vmul.f32 %v474, %v474
      %v574 = vmul.f32 %v479, %v479
      %v575 = vmul.f32 %v482, %v482
      %v576 = vmul.f32 %v487, %v487
      %v577 = vmul.f32 %v490, %v490
      %v578 = vmul.f32 %v495, %v495
      %v579 = vmul.f32 %v498, %v498
      %v580 = vmul.f32 %v503, %v503
      %v581 = vmul.f32 %v506, %v506
      %v582 = vadd.f32 %v550, %v551
      %v583 = vadd.f32 %v582, %v552
      %v584 = vadd.f32 %v583, %v553
      %v585 = vadd.f32 %v584, %v554
      %v586 = vadd.f32 %v585, %v555
      %v587 = vadd.f32 %v586, %v556
      %v588 = vadd.f32 %v587, %v557
      %v589 = vadd.f32 %v588, %v558
      %v590 = vadd.f32 %v589, %v559
      %v591 = vadd.f32 %v590, %v560
      %v592 = vadd.f32 %v591, %v561
      %v593 = vadd.f32 %v592, %v562
      %v594 = vadd.f32 %v593, %v563
      %v595 = vadd.f32 %v594, %v564
      %v596 = vadd.f32 %v595, %v565
      %v597 = vadd.f32 %v596, %v566
      %v598 = vadd.f32 %v597, %v567
      %v599 = vadd.f32 %v598, %v568
      %v600 = vadd.f32 %v599, %v569
      %v601 = vadd.f32 %v600, %v570
      %v602 = vadd.f32 %v601, %v571
      %v603 = vadd.f32 %v602, %v572
      %v604 = vadd.f32 %v603, %v573
      %v605 = vadd.f32 %v604, %v574
      %v606 = vadd.f32 %v605, %v575
      %v607 = vadd.f32 %v606, %v576
      %v608 = vadd.f32 %v607, %v577
      %v609 = vadd.f32 %v608, %v578
      %v610 = vadd.f32 %v609, %v579
      %v611 = vadd.f32 %v610, %v580
      %v612 = vadd.f32 %v611, %v581
      %v613 = vrot.slane %v612, 4
      %v614 = vadd.f32 %v612, %v613
      %v615 = vrot.slane %v614, 2
      %v616 = vadd.f32 %v614, %v615
      %v617 = vrot.slane %v616, 1
      %v618 = vadd.f32 %v616, %v617
      %v619 = vadd.f32 %v549, %v618
      %620 = vst [vmem:[%s3] sm:$0x1] %v619
      // Predicated region
      $region33: #{conv_bn_relu.2} parent=27 // pred_check
        %p621 = pneg %p75
      $region34: #{conv_bn_relu.2} parent=27 // pred_check_branch
        %623 = sbr.rel (%p621) target = $region36
      $region35: #{conv_bn_relu.2} parent=27 // pred_region
        _
      $region36: #{conv_bn_relu.2} parent=27 // pred_fallthru
        _
      // Predicated region
      $region37: #{conv_bn_relu.2} parent=27 // pred_check
        %p624 = pneg %p96
      $region38: #{conv_bn_relu.2} parent=27 // pred_check_branch
        %626 = sbr.rel (%p624) target = $region40
      $region39: #{conv_bn_relu.2} parent=27 // pred_region
        _
      $region40: #{conv_bn_relu.2} parent=27 // pred_fallthru
        _
      // Predicated region
      $region41: #{conv_bn_relu.2} parent=27 // pred_check
        %p627 = pneg %p75
      $region42: #{conv_bn_relu.2} parent=27 // pred_check_branch
        %629 = sbr.rel (%p627) target = $region44
      $region43: #{conv_bn_relu.2} parent=27 // pred_region
        _
      $region44: #{conv_bn_relu.2} parent=27 // pred_fallthru
        _
      // Predicated region
      $region45: #{conv_bn_relu.2} parent=27 // pred_check
        %p630 = pneg %p96
      $region46: #{conv_bn_relu.2} parent=27 // pred_check_branch
        %632 = sbr.rel (%p630) target = $region48
      $region47: #{conv_bn_relu.2} parent=27 // pred_region
        _
      $region48: #{conv_bn_relu.2} parent=27 // pred_fallthru
        _
    $region28: #{conv_bn_relu.2} parent=5 // pred_fallthru
      _
    %p633 = scmp.le.s32.totalorder 2, %s10
    // Predicated region
    $region49: #{conv_bn_relu.2} parent=5 // pred_check
      %p634 = pneg %p633
    $region50: #{conv_bn_relu.2} parent=5 // pred_check_branch
      %636 = sbr.rel (%p634) target = $region52
    $region51: #{conv_bn_relu.2} parent=5 // pred_region
      %s637 = ssub.s32 %s10, 2
    $region52: #{conv_bn_relu.2} parent=5 // pred_fallthru
      _
  $region6: #{conv_bn_relu.2} parent=0 // loop_footer
    %s14 = sadd.s32 1, %s10
  $region7: #{conv_bn_relu.2} parent=0 // loop_footer_branch
    %9 = sbr.rel target = $region3
  $region8: #{conv_bn_relu.2} parent=0 // loop_exit
    _

</llo_original>
